<compile_context>
chip_gen: v5e
topology: v5e:2x2
jax: 0.10.0
libtpu: 0.0.40
codegen_flags: <defaults>
</compile_context>

<pallas_src>
import functools

import jax
import jax.numpy as jnp
from jax import lax
from jax.experimental import pallas as pl
from jax.experimental.pallas import tpu as pltpu

# erf(z) ~= tanh(_ERF_TANH_C1 * z + _ERF_TANH_C3 * z**3)
_ERF_TANH_C1 = 1.1283791670955126      # 2/sqrt(pi)
_ERF_TANH_C3 = 0.1009109307329795      # sqrt(2/pi) * 0.044715 * (sqrt(2))**3


def _round_up(v, m):
    return ((v + m - 1) // m) * m


def _smu_kernel(coef_ref, x_ref, o_ref, *, c0, c1, approx_erf):
    # Scalar SMEM reads first, before any vector work.
    k1 = coef_ref[0]          # 2/sqrt(pi) * b
    k3 = coef_ref[1]          # 0.1009109 * b**3
    b = coef_ref[2]           # b = mu * (1 - alpha)   (exact path only)

    x = x_ref[...].astype(jnp.float32)     # f32 math even for bf16 I/O
    if approx_erf:
        # erf(b*x) ~= tanh(x*(k1 + k3*x^2)) -> one EUP tanh, few VALU ops.
        e = jnp.tanh(x * (k1 + k3 * (x * x)))
    else:
        e = lax.erf(b * x)
    # Factored form: one fewer vmul than c0*x + c1*x*e.
    o_ref[...] = (x * (c0 + c1 * e)).astype(o_ref.dtype)


def smu_forward(x, mu, *, alpha=0.25, approx_erf=True, donate_input=False):
    """SMU activation. x: any-shape array (e.g. NCHW), mu: () scalar."""
    orig_shape = x.shape
    orig_dtype = x.dtype
    n = x.size
    itemsize = jnp.dtype(orig_dtype).itemsize
    sublane = max(8, 32 // itemsize)        # f32: 8, bf16: 16, int8: 32

    # --- Lay the tensor out as a lane-dense (rows, lane) slab, avoiding any
    # --- pad/concat copy whenever the element count is a multiple of 128.
    flat = jnp.reshape(x, (-1,))
    pad = 0
    lane = None
    for w in (1024, 512, 256, 128):
        if n % w == 0:
            lane = w
            break
    if lane is None:
        # Rare ragged case (n % 128 != 0): pay one pad copy + tail slice.
        lane = 128
        pad = (-n) % lane
        flat = jnp.pad(flat, (0, pad))
    rows = flat.size // lane
    slab = flat.reshape(rows, lane)

    # --- VMEM-aware block sizing.
    try:
        vmem_cap = pltpu.get_tpu_info().vmem_capacity_bytes
    except Exception:
        vmem_cap = 64 << 20                  # conservative (v7x-safe) fallback
    if vmem_cap >= (100 << 20):              # v5e / v6e: 128 MiB VMEM
        target_block_bytes = 8 << 20
        vmem_limit = 64 << 20
    else:                                    # v7x: 64 MiB VMEM per TC
        target_block_bytes = 4 << 20
        vmem_limit = 32 << 20

    br = max(sublane,
             (target_block_bytes // (lane * itemsize)) // sublane * sublane)
    if rows <= br:
        if rows >= 2 * sublane:
            # Split into >= 2 blocks so both v7x TensorCores get work
            # (no-op cost on single-TC v5e/v6e).
            br = _round_up(pl.cdiv(rows, 2), sublane)
        else:
            br = rows                        # single full-extent block
    grid = (pl.cdiv(rows, br),)

    # --- Scalar coefficients (computed once, read from SMEM).
    b = jnp.asarray(mu, jnp.float32) * jnp.float32(1.0 - alpha)
    coef = jnp.stack([jnp.float32(_ERF_TANH_C1) * b,
                      jnp.float32(_ERF_TANH_C3) * b * b * b,
                      b]).astype(jnp.float32)
    c0 = float((1.0 + alpha) * 0.5)
    c1 = float((1.0 - alpha) * 0.5)

    kernel = functools.partial(_smu_kernel, c0=c0, c1=c1, approx_erf=approx_erf)
    alias = {1: 0} if (donate_input and pad == 0) else {}

    out = pl.pallas_call(
        kernel,
        out_shape=jax.ShapeDtypeStruct((rows, lane), orig_dtype),
        grid_spec=pltpu.PrefetchScalarGridSpec(
            num_scalar_prefetch=0,
            grid=grid,
            in_specs=[
                pl.BlockSpec(memory_space=pltpu.SMEM),               # coef (3,)
                pl.BlockSpec((br, lane), lambda i: (i, 0)),          # x tile
            ],
            out_specs=pl.BlockSpec((br, lane), lambda i: (i, 0)),
        ),
        compiler_params=pltpu.CompilerParams(
            dimension_semantics=("parallel",),
            vmem_limit_bytes=vmem_limit,
        ),
        input_output_aliases=alias,
    )(coef, slab)

    out_flat = out.reshape(-1)
    if pad:
        out_flat = out_flat[:n]
    return out_flat.reshape(orig_shape)


def smu_reference(x, mu, alpha=0.25):
    xf = x.astype(jnp.float32)
    y = ((1.0 + alpha) * xf
         + (1.0 - alpha) * xf * lax.erf(mu * (1.0 - alpha) * xf)) / 2.0
    return y.astype(x.dtype)


if __name__ == "__main__":
    key = jax.random.PRNGKey(0)
    # NCHW input consistent with a conv-net denoiser activation.
    x = jax.random.normal(key, (2, 4, 16, 16), dtype=jnp.float32)

    # Deterministic parameter init, matching nn.Parameter(torch.tensor(1e6)).
    alpha = 0.25
    mu = jnp.float32(1000000.0)

    y_ref = smu_reference(x, mu, alpha=alpha)

    # Default (EUP tanh-based erf) path.
    y = jax.block_until_ready(smu_forward(x, mu, alpha=alpha))
    assert y.shape == x.shape and y.dtype == x.dtype
    assert jnp.allclose(y, y_ref, atol=1e-5, rtol=1e-5)

    # Exact-erf fallback path.
    y_exact = jax.block_until_ready(
        smu_forward(x, mu, alpha=alpha, approx_erf=False))
    assert jnp.allclose(y_exact, y_ref, atol=1e-5, rtol=1e-5)

    print("KERNEL_OK")
</pallas_src>

<mosaic_0001>
module attributes {stable_mosaic.version = 11 : i64} {
  func.func @_smu_kernel(%arg0: i32, %arg1: memref<3xf32, #tpu.memory_space<smem>>, %arg2: memref<2x1024xf32, #tpu.memory_space<vmem>>, %arg3: memref<2x1024xf32, #tpu.memory_space<vmem>>) attributes {dimension_semantics = [#tpu.dimension_semantics<parallel>], iteration_bounds = array<i64: 1>, scalar_prefetch = 0 : i64, scratch_operands = 0 : i64, tpu.core_type = #tpu.core_type<tc>, window_params = [{transform_indices = @transform_0, window_bounds = array<i64: 3>}, {transform_indices = @transform_1, window_bounds = array<i64: 2, 1024>}, {transform_indices = @transform_2, window_bounds = array<i64: 2, 1024>}]} {
    %c0 = arith.constant 0 : index
    %0 = memref.load %arg1[%c0] : memref<3xf32, #tpu.memory_space<smem>>
    %c1 = arith.constant 1 : index
    %1 = memref.load %arg1[%c1] : memref<3xf32, #tpu.memory_space<smem>>
    %c0_0 = arith.constant 0 : index
    %c0_1 = arith.constant 0 : index
    %2 = vector.load %arg2[%c0_0, %c0_1] : memref<2x1024xf32, #tpu.memory_space<vmem>>, vector<2x1024xf32>
    %3 = arith.mulf %2, %2 : vector<2x1024xf32>
    %4 = vector.broadcast %1 : f32 to vector<2x1024xf32>
    %5 = arith.mulf %4, %3 : vector<2x1024xf32>
    %6 = vector.broadcast %0 : f32 to vector<2x1024xf32>
    %7 = arith.addf %6, %5 : vector<2x1024xf32>
    %8 = arith.mulf %2, %7 : vector<2x1024xf32>
    %9 = math.tanh %8 : vector<2x1024xf32>
    %cst = arith.constant 3.750000e-01 : f32
    %10 = vector.broadcast %cst : f32 to vector<2x1024xf32>
    %11 = arith.mulf %10, %9 : vector<2x1024xf32>
    %cst_2 = arith.constant 6.250000e-01 : f32
    %12 = vector.broadcast %cst_2 : f32 to vector<2x1024xf32>
    %13 = arith.addf %12, %11 : vector<2x1024xf32>
    %14 = arith.mulf %2, %13 : vector<2x1024xf32>
    %c0_3 = arith.constant 0 : index
    %c0_4 = arith.constant 0 : index
    %15 = vector.load %arg3[%c0_3, %c0_4] : memref<2x1024xf32, #tpu.memory_space<vmem>>, vector<2x1024xf32>
    tpu.vector_store %arg3[%c0_3, %c0_4], %14 {strides = array<i32>} : memref<2x1024xf32, #tpu.memory_space<vmem>>, vector<2x1024xf32>,
    return
  }
  func.func @transform_0(%arg0: i32) -> i32 {
    %c0_i32 = arith.constant 0 : i32
    %c0_i32_0 = arith.constant 0 : i32
    return %c0_i32 : i32
  }
  func.func @transform_1(%arg0: i32) -> (i32, i32) {
    %c0_i32 = arith.constant 0 : i32
    %c0_i32_0 = arith.constant 0 : i32
    return %arg0, %c0_i32 : i32, i32
  }
  func.func @transform_2(%arg0: i32) -> (i32, i32) {
    %c0_i32 = arith.constant 0 : i32
    %c0_i32_0 = arith.constant 0 : i32
    return %arg0, %c0_i32 : i32, i32
  }
}

</mosaic_0001>

<llo_original>
// kernel: tpu_custom_call.1
$region0: #{tpu_custom_call.1}
  #allocation0 [shape = 'u32[]', space=smem, size = 0x4, offset = 0x4, fixed_abs, tag = 'smem constant byte address 0x4 - core index']
  #allocation1 [shape = 'u32[72,128]{1,0:T(1,128)}', space=vmem, size = 0x9000, scoped, tag = 'internal scratch']
  %s0 = inlined_call_operand.hbm [shape: f32[3], index: 0, kind: input, shape index: {}]
  %s1 = inlined_call_operand.hbm [shape: f32[2,1024], index: 1, kind: input, shape index: {}]
  %s2 = inlined_call_operand.hbm [shape: f32[2,1024], index: 2, kind: output, shape index: {}]
  %s3 = sld [smem:[#allocation0]]
  $region26: #{tpu_custom_call.1} parent=0
    _
  %s5 = ssub.s32 1, %s3
  %s6 = scalar_select 0, %s5, %s3
  $region1: #{tpu_custom_call.1} parent=0
    #allocation2 [shape = 'u8[512]{0}', space=smem, size = 0x200, scoped, tag = 'input window, operand 0, single buffered']
    #allocation3 [shape = 's32[1]{0}', space=sflag, size = 0x4, scoped, tag = 'scoped memory for tpu_custom_call.1']
    #allocation4 [shape = 's32[1]{0}', space=sflag, size = 0x4, scoped, tag = 'scoped memory for tpu_custom_call.1']
    #allocation5 [shape = 's32[1]{0}', space=sflag, size = 0x4, scoped, tag = 'scoped memory for tpu_custom_call.1']
    #allocation6 [shape = 'u8[8192]{0}', space=vmem, size = 0x2000, scoped, tag = 'input window, operand 1, single buffered']
    #allocation7 [shape = 'u8[8192]{0}', space=vmem, size = 0x2000, scoped, tag = 'output window, operand 0, single buffered']
    %7 = vsyncpa [#allocation5], 0
    %8 = vsyncpa [#allocation3], 0
    %9 = vsyncpa [#allocation4], 0
    // Predicated region
    $region2: #{tpu_custom_call.1} parent=1 // pred_check
      _
    $region3: #{tpu_custom_call.1} parent=1 // pred_check_branch
      %11 = sbr.rel (0) target = $region5
    $region4: #{tpu_custom_call.1} parent=1 // pred_region
      %13 = vsyncadd [#allocation5], 0
      %s15 = sshll.u32 %s0, 4
      %s16 = int_to_ptr.hbm [resolvable:$true] %s15
      %18 = dma.hbm_to_smem %s16, 16, [#allocation2], [#allocation5]
    $region5: #{tpu_custom_call.1} parent=1 // pred_fallthru
      _
    // Predicated region
    $region6: #{tpu_custom_call.1} parent=1 // pred_check
      _
    $region7: #{tpu_custom_call.1} parent=1 // pred_check_branch
      %20 = sbr.rel (0) target = $region9
    $region8: #{tpu_custom_call.1} parent=1 // pred_region
      %22 = vsyncadd [#allocation3], 0
      %s24 = sshll.u32 %s1, 4
      %s25 = int_to_ptr.hbm [resolvable:$true] %s24
      %s26 = sshll.u32 [#allocation6], 4
      %s27 = int_to_ptr.vmem [resolvable:$true] %s26
      %29 = dma.hbm_to_vmem [thread:$0]  %s25, 256, %s27, [#allocation3]
    $region9: #{tpu_custom_call.1} parent=1 // pred_fallthru
      _
    // Predicated region
    $region10: #{tpu_custom_call.1} parent=1 // pred_check
      _
    $region11: #{tpu_custom_call.1} parent=1 // pred_check_branch
      %31 = sbr.rel (0) target = $region13
    $region12: #{tpu_custom_call.1} parent=1 // pred_region
      %33 = dma.done [#allocation5], 16
    $region13: #{tpu_custom_call.1} parent=1 // pred_fallthru
      _
    // Predicated region
    $region14: #{tpu_custom_call.1} parent=1 // pred_check
      _
    $region15: #{tpu_custom_call.1} parent=1 // pred_check_branch
      %35 = sbr.rel (0) target = $region17
    $region16: #{tpu_custom_call.1} parent=1 // pred_region
      %37 = dma.done [#allocation3], 256
    $region17: #{tpu_custom_call.1} parent=1 // pred_fallthru
      _
    %38 = sfence
    %s39 = sld [smem:[#allocation2]]
    %s40 = sld [smem:[#allocation2 + $0x1]]
    %v41 = vld [vmem:[#allocation6] sm:$0xff]
    %v42 = vld [vmem:[#allocation6 + $0x8] sm:$0xff]
    %v43 = vmul.f32 %v41, %v41
    %v44 = vmul.f32 %v42, %v42
    %v45 = vstv %s40
    %v46 = vmul.f32 %v45, %v43
    %v47 = vmul.f32 %v45, %v44
    %v48 = vstv %s39
    %v49 = vadd.f32 %v48, %v46
    %v50 = vadd.f32 %v48, %v47
    %v51 = vmul.f32 %v41, %v49
    %v52 = vmul.f32 %v42, %v50
    %v53 = vtanh.pop %v51
    %v54 = vtanh.pop %v52
    %v55 = vmul.f32 %v53, 0.375
    %v56 = vmul.f32 %v54, 0.375
    %v57 = vadd.f32 %v55, 0.625
    %v58 = vadd.f32 %v56, 0.625
    %v59 = vmul.f32 %v41, %v57
    %v60 = vmul.f32 %v42, %v58
    %61 = vst [vmem:[#allocation7] sm:$0xff] %v59
    %62 = vst [vmem:[#allocation7 + $0x8] sm:$0xff] %v60
    // Predicated region
    $region18: #{tpu_custom_call.1} parent=1 // pred_check
      _
    $region19: #{tpu_custom_call.1} parent=1 // pred_check_branch
      %64 = sbr.rel (0) target = $region21
    $region20: #{tpu_custom_call.1} parent=1 // pred_region
      %66 = vsyncadd [#allocation4], 0
      %s68 = sshll.u32 [#allocation7], 4
      %s69 = int_to_ptr.vmem [resolvable:$true] %s68
      %s70 = sshll.u32 %s2, 4
      %s71 = int_to_ptr.hbm [resolvable:$true] %s70
      %73 = dma.vmem_to_hbm [thread:$0]  %s69, 256, %s71, [#allocation4]
    $region21: #{tpu_custom_call.1} parent=1 // pred_fallthru
      _
    // Predicated region
    $region22: #{tpu_custom_call.1} parent=1 // pred_check
      _
    $region23: #{tpu_custom_call.1} parent=1 // pred_check_branch
      %75 = sbr.rel (0) target = $region25
    $region24: #{tpu_custom_call.1} parent=1 // pred_region
      %77 = dma.done [#allocation4], 256
    $region25: #{tpu_custom_call.1} parent=1 // pred_fallthru
      _
    %78 = vsyncpa [#allocation3], 1
    %79 = vsyncpa [#allocation4], 1
    %80 = vsyncpa [#allocation5], 1

</llo_original>
